<compile_context>
chip_gen: v7x
topology: tpu7x:2x2x1
jax: 0.10.0
libtpu: 0.0.40
codegen_flags: <defaults>
</compile_context>

<pallas_src>
import jax
import jax.numpy as jnp
from jax.experimental import pallas as pl
from jax.experimental.pallas import tpu as pltpu

K_IN = 10                        # fc_1 input features
N_OUT = 2                        # fc_3 output features
ROW_GROUP = 64                   # batch rows folded into one lane-dense super-row
SUPER_K = ROW_GROUP * K_IN       # 640  (multiple of 128 -> lane-dense input)
SUPER_N = ROW_GROUP * N_OUT      # 128  (lane-dense output, unmasked vst)
SUBLANE = 8
TB_ALIGN = ROW_GROUP * SUBLANE   # 512 rows: minimum batch-tile granularity
MAX_TB = 32768                   # rows per grid step at large B (~1.25 MiB/buffer)
MIN_PALLAS_BATCH = 4096          # below this, plain XLA fusion wins


def _round_up(n, m):
    return ((n + m - 1) // m) * m


def fused_affine_relu_kernel(x_ref, w_ref, b_ref, o_ref):
    # x_ref: (tbr, 640)  -- 64 batch rows packed per super-row (free reshape)
    # w_ref: (640, 128)  -- block-diagonal copies of the collapsed (10,2) weight
    # b_ref: (1, 128)    -- tiled collapsed bias
    # o_ref: (tbr, 128)  -- lane-dense; reshapes back to (tb, 2) for free
    y = jnp.dot(x_ref[...], w_ref[...], preferred_element_type=jnp.float32)
    o_ref[...] = jnp.maximum(y + b_ref[...], 0.0).astype(o_ref.dtype)


def _collapse_params(params):
    """Fold Linear(10,20)->Linear(20,40)->Linear(40,2) into one affine map."""
    w1, b1, w2, b2, w3, b3 = params
    w_eff = (w1 @ w2) @ w3                      # (10, 2)
    b_eff = (b1 @ w2 + b2) @ w3 + b3            # (1, 2)
    return w_eff.astype(jnp.float32), b_eff.astype(jnp.float32)


def _expand_params(params):
    """Block-diagonal expansion: 64 copies of (10,2) -> (640,128) slab."""
    w_eff, b_eff = _collapse_params(params)
    w_big = jnp.kron(jnp.eye(ROW_GROUP, dtype=jnp.float32), w_eff)   # (640, 128)
    b_big = jnp.tile(b_eff, (1, ROW_GROUP))                          # (1, 128)
    return w_big, b_big


def _forward_jnp(x, params):
    """Small-batch fast path: single fused affine + ReLU in plain XLA."""
    w_eff, b_eff = _collapse_params(params)
    return jnp.maximum(x.astype(jnp.float32) @ w_eff + b_eff, 0.0)


def _forward_pallas(x, params):
    """Pallas path: x (B, 10) float -> (B, 2) float32."""
    B = x.shape[0]
    w_big, b_big = _expand_params(params)

    # Rows per grid step: multiple of 512, at least 2 grid steps (so both v7x
    # TensorCores get work; harmless on single-TC v5e/v6e), capped at MAX_TB so
    # double-buffered tiles stay a few MiB (fits v7x's smaller VMEM too).
    tb = min(MAX_TB, max(TB_ALIGN, _round_up((B + 1) // 2, TB_ALIGN)))

    # Pad batch only to the 512-row reshape granularity (skipped when aligned).
    # Raggedness vs the tile size is handled by Pallas' masked last block;
    # that is safe because each output row depends only on its own input row.
    b_pad = _round_up(B, TB_ALIGN)
    x = x.astype(jnp.float32)
    if b_pad != B:
        x = jnp.pad(x, ((0, b_pad - B), (0, 0)))

    # FREE row-major reshape: (b_pad, 10) -> (b_pad/64, 640).
    R = b_pad // ROW_GROUP
    xr = x.reshape(R, SUPER_K)
    tbr = tb // ROW_GROUP                       # super-rows per step (mult of 8)

    grid = (pl.cdiv(R, tbr),)
    bytes_accessed = (xr.size + w_big.size + b_big.size + R * SUPER_N) * 4

    out = pl.pallas_call(
        fused_affine_relu_kernel,
        out_shape=jax.ShapeDtypeStruct((R, SUPER_N), jnp.float32),
        grid=grid,
        in_specs=[
            pl.BlockSpec((tbr, SUPER_K), lambda i: (i, 0)),
            # Constant block index -> parameters DMA'd once, VMEM-resident.
            pl.BlockSpec((SUPER_K, SUPER_N), lambda i: (0, 0)),
            pl.BlockSpec((1, SUPER_N), lambda i: (0, 0)),
        ],
        out_specs=pl.BlockSpec((tbr, SUPER_N), lambda i: (i, 0)),
        compiler_params=pltpu.CompilerParams(
            dimension_semantics=("parallel",)),
        cost_estimate=pl.CostEstimate(
            flops=2 * R * SUPER_K * SUPER_N,
            transcendentals=0,
            bytes_accessed=bytes_accessed),
    )(xr, w_big, b_big)

    # FREE reshape back: (R, 128) -> (b_pad, 2); drop pad rows.
    return out.reshape(b_pad, N_OUT)[:B]


def network_forward(x, params, *, min_pallas_batch=MIN_PALLAS_BATCH):
    """relu(fc_3(fc_2(fc_1(x)))) — dispatches to Pallas only where tiling pays."""
    if x.shape[0] < min_pallas_batch:
        return _forward_jnp(x, params)
    return _forward_pallas(x, params)


def init_params(key):
    """Deterministic init mimicking nn.Linear.

    PyTorch Linear stores weight as (out, in); we store the transpose (in, out)
    so the math is x @ W. Uniform(-1/sqrt(in), 1/sqrt(in)) matches PyTorch's
    default init distribution.
    """
    dims = [(10, 20), (20, 40), (40, 2)]
    params = []
    for (din, dout) in dims:
        key, kw, kb = jax.random.split(key, 3)
        bound = 1.0 / jnp.sqrt(jnp.float32(din))
        w = jax.random.uniform(kw, (din, dout), jnp.float32, -bound, bound)
        b = jax.random.uniform(kb, (1, dout), jnp.float32, -bound, bound)
        params += [w, b]
    return tuple(params)


if __name__ == "__main__":
    key = jax.random.PRNGKey(0)
    key, kx_small, kx_big = jax.random.split(key, 3)
    params = init_params(key)

    def reference(x):
        w1, b1, w2, b2, w3, b3 = params
        return jnp.maximum(((x @ w1 + b1) @ w2 + b2) @ w3 + b3, 0.0)

    # Small batch: dispatcher takes the plain-XLA fast path.
    x_small = jax.random.normal(kx_small, (8, K_IN), dtype=jnp.float32)
    out_small = jax.block_until_ready(network_forward(x_small, params))
    assert out_small.shape == (8, N_OUT)
    assert jnp.allclose(out_small, reference(x_small), atol=1e-4, rtol=1e-4)

    # Pallas kernel path: non-tile-aligned batch exercises the batch pad,
    # a 2-step grid (v7x megacore) and the ragged/masked last block.
    B = 1500
    x = jax.random.normal(kx_big, (B, K_IN), dtype=jnp.float32)
    out = jax.block_until_ready(_forward_pallas(x, params))
    ref = reference(x)
    assert out.shape == (B, N_OUT)
    assert jnp.allclose(out, ref, atol=1e-4, rtol=1e-4), (
        float(jnp.max(jnp.abs(out - ref))))

    print("KERNEL_OK")
</pallas_src>

<mosaic_0001>
module attributes {stable_mosaic.version = 11 : i64} {
  func.func @fused_affine_relu_kernel(%arg0: i32, %arg1: memref<16x640xf32, #tpu.memory_space<vmem>>, %arg2: memref<640x128xf32, #tpu.memory_space<vmem>>, %arg3: memref<1x128xf32, #tpu.memory_space<vmem>>, %arg4: memref<16x128xf32, #tpu.memory_space<vmem>>) attributes {dimension_semantics = [#tpu.dimension_semantics<parallel>], iteration_bounds = array<i64: 2>, scalar_prefetch = 0 : i64, scratch_operands = 0 : i64, tpu.core_type = #tpu.core_type<tc>, window_params = [{transform_indices = @transform_0, window_bounds = array<i64: 16, 640>}, {pipeline_mode = #tpu.pipeline_mode<synchronous>, transform_indices = @transform_1, window_bounds = array<i64: 640, 128>}, {pipeline_mode = #tpu.pipeline_mode<synchronous>, transform_indices = @transform_2, window_bounds = array<i64: 1, 128>}, {transform_indices = @transform_3, window_bounds = array<i64: 16, 128>}]} {
    %c0 = arith.constant 0 : index
    %c0_0 = arith.constant 0 : index
    %0 = vector.load %arg1[%c0, %c0_0] : memref<16x640xf32, #tpu.memory_space<vmem>>, vector<16x640xf32>
    %c0_1 = arith.constant 0 : index
    %c0_2 = arith.constant 0 : index
    %1 = vector.load %arg2[%c0_1, %c0_2] : memref<640x128xf32, #tpu.memory_space<vmem>>, vector<640x128xf32>
    %cst = arith.constant dense<0.000000e+00> : vector<16x128xf32>
    %2 = tpu.matmul %0, %1, %cst {dimension_numbers = #tpu.dot_dimension_numbers<[1], [0], [0], [1], [0, 0, 1, 1], [], []>} : vector<16x640xf32>, vector<640x128xf32>, vector<16x128xf32> -> vector<16x128xf32>
    %c0_3 = arith.constant 0 : index
    %c0_4 = arith.constant 0 : index
    %3 = vector.load %arg3[%c0_3, %c0_4] : memref<1x128xf32, #tpu.memory_space<vmem>>, vector<1x128xf32>
    %4 = vector.broadcast %3 : vector<1x128xf32> to vector<16x128xf32>
    %5 = arith.addf %2, %4 : vector<16x128xf32>
    %cst_5 = arith.constant 0.000000e+00 : f32
    %6 = vector.broadcast %cst_5 : f32 to vector<16x128xf32>
    %7 = arith.maximumf %5, %6 : vector<16x128xf32>
    %c0_6 = arith.constant 0 : index
    %c0_7 = arith.constant 0 : index
    %8 = vector.load %arg4[%c0_6, %c0_7] : memref<16x128xf32, #tpu.memory_space<vmem>>, vector<16x128xf32>
    tpu.vector_store %arg4[%c0_6, %c0_7], %7 {strides = array<i32>} : memref<16x128xf32, #tpu.memory_space<vmem>>, vector<16x128xf32>,
    return
  }
  func.func @transform_0(%arg0: i32) -> (i32, i32) {
    %c0_i32 = arith.constant 0 : i32
    %c0_i32_0 = arith.constant 0 : i32
    return %arg0, %c0_i32 : i32, i32
  }
  func.func @transform_1(%arg0: i32) -> (i32, i32) {
    %c0_i32 = arith.constant 0 : i32
    %c0_i32_0 = arith.constant 0 : i32
    %c0_i32_1 = arith.constant 0 : i32
    return %c0_i32, %c0_i32_0 : i32, i32
  }
  func.func @transform_2(%arg0: i32) -> (i32, i32) {
    %c0_i32 = arith.constant 0 : i32
    %c0_i32_0 = arith.constant 0 : i32
    %c0_i32_1 = arith.constant 0 : i32
    return %c0_i32, %c0_i32_0 : i32, i32
  }
  func.func @transform_3(%arg0: i32) -> (i32, i32) {
    %c0_i32 = arith.constant 0 : i32
    %c0_i32_0 = arith.constant 0 : i32
    return %arg0, %c0_i32 : i32, i32
  }
}

</mosaic_0001>

<llo_original>
// kernel: tpu_custom_call.1
$region0: #{tpu_custom_call.1}
  #allocation0 [shape = 'u32[]', space=smem, size = 0x4, offset = 0x4, fixed_abs, tag = 'smem constant byte address 0x4 - core index']
  #allocation1 [shape = 'u32[144,128]{1,0:T(1,128)}', space=vmem, size = 0x12000, scoped, tag = 'internal scratch']
  %s0 = inlined_call_operand.hbm [shape: f32[24,640], index: 0, kind: input, shape index: {}]
  %s1 = inlined_call_operand.hbm [shape: f32[640,128], index: 1, kind: input, shape index: {}]
  %s2 = inlined_call_operand.vmem [shape: f32[1,128], index: 2, kind: input, shape index: {}]
  %s3 = inlined_call_operand.hbm [shape: f32[24,128], index: 3, kind: output, shape index: {}]
  %s4 = sld [smem:[#allocation0]]
  $region53: #{tpu_custom_call.1} parent=0
    _
  %s6 = ssub.s32 1, %s4
  %s7 = scalar_select 0, %s6, %s4
  $region1: #{tpu_custom_call.1} parent=0
    #allocation2 [shape = 'u8[81920]{0}', space=vmem, size = 0x14000, scoped, tag = 'input window, operand 0']
    #allocation3 [shape = 's32[2]{0}', space=sflag, size = 0x8, scoped, tag = 'scoped memory for tpu_custom_call.1']
    #allocation4 [shape = 's32[2]{0}', space=sflag, size = 0x8, scoped, tag = 'scoped memory for tpu_custom_call.1']
    #allocation5 [shape = 'u8[327680]{0}', space=vmem, size = 0x50000, scoped, tag = 'input window, operand 1, single buffered']
    #allocation6 [shape = 's32[1]{0}', space=sflag, size = 0x4, scoped, tag = 'scoped memory for tpu_custom_call.1']
    #allocation7 [shape = 'u8[16384]{0}', space=vmem, size = 0x4000, scoped, tag = 'output window, operand 0']
    %8 = vsyncpa [#allocation3], 0
    %s9 = scalar_lea.sflag [#allocation3], 1
    %10 = vsyncpa %s9, 0
    %11 = vsyncpa [#allocation6], 0
    %12 = vsyncpa [#allocation4], 0
    %s13 = scalar_lea.sflag [#allocation4], 1
    %14 = vsyncpa %s13, 0
    loop: start=0, step=1, limit=4
    $region2: #{tpu_custom_call.1} parent=1 // loop_pre_header
      _
    $region3: #{tpu_custom_call.1} parent=1 // loop_header
      %s16 = sphi 0, %s20
      %p17 = scmp.ge.s32.totalorder %s16, 4
      %s26 = sphi 0, %s28
      %s29 = sphi 0, %s26
      %s30 = sphi 0, %s29
      %s46 = sphi 0, %s30
      %s50 = sphi 0, %s50
      %s52 = sphi 0, %s50
      %s53 = sphi 0, %s52
      %s67 = sphi 0, %s53
      %s71 = sphi 0, %s71
      %s73 = sphi 0, %s71
      %s74 = sphi 0, %s73
      %s88 = sphi 0, %s74
      %s94 = sphi 0, %s96
      %s97 = sphi 0, %s94
      %s98 = sphi 0, %s97
      %s114 = sphi 0, %s98
    $region4: #{tpu_custom_call.1} parent=1 // loop_header_branch
      %19 = sbr.rel (%p17) target = $region8
    $region5: #{tpu_custom_call.1} parent=1 // loop_body
      %s21 = ssub.s32 %s16, 1
      %s22 = ssub.s32 %s16, 2
      %s23 = sadd.s32 %s16, 1
      %s24 = ssub.s32 %s16, %s23
      %p25 = scmp.eq.s32.totalorder %s24, 0
      %s27 = sadd.s32 %s26, 1
      %s28 = scalar_select %p25, %s26, %s27
      %p31 = pneg %p25
      %p32 = scmp.eq.s32.totalorder %s16, 1
      %p33 = por %p31, %p32
      %p34 = scmp.ne.s32.totalorder %s26, %s29
      %p35 = scmp.eq.s32.totalorder %s16, 0
      %p36 = por %p34, %p35
      %p37 = scmp.ne.s32.totalorder %s26, %s29
      %p38 = scmp.eq.s32.totalorder %s21, 1
      %p39 = por %p37, %p38
      %p40 = scmp.ne.s32.totalorder %s29, %s30
      %p41 = scmp.eq.s32.totalorder %s21, 0
      %p42 = por %p40, %p41
      %p43 = scmp.ne.s32.totalorder %s29, %s30
      %p44 = scmp.eq.s32.totalorder %s22, 1
      %p45 = por %p43, %p44
      %p47 = scmp.ne.s32.totalorder %s30, %s46
      %p48 = scmp.eq.s32.totalorder %s22, 0
      %p49 = por %p47, %p48
      %s51 = sadd.s32 %s50, 1
      %p54 = scmp.eq.s32.totalorder %s16, 1
      %p55 = scmp.ne.s32.totalorder %s50, %s52
      %p56 = scmp.eq.s32.totalorder %s16, 0
      %p57 = por %p55, %p56
      %p58 = scmp.ne.s32.totalorder %s50, %s52
      %p59 = scmp.eq.s32.totalorder %s21, 1
      %p60 = por %p58, %p59
      %p61 = scmp.ne.s32.totalorder %s52, %s53
      %p62 = scmp.eq.s32.totalorder %s21, 0
      %p63 = por %p61, %p62
      %p64 = scmp.ne.s32.totalorder %s52, %s53
      %p65 = scmp.eq.s32.totalorder %s22, 1
      %p66 = por %p64, %p65
      %p68 = scmp.ne.s32.totalorder %s53, %s67
      %p69 = scmp.eq.s32.totalorder %s22, 0
      %p70 = por %p68, %p69
      %s72 = sadd.s32 %s71, 1
      %p75 = scmp.eq.s32.totalorder %s16, 1
      %p76 = scmp.ne.s32.totalorder %s71, %s73
      %p77 = scmp.eq.s32.totalorder %s16, 0
      %p78 = por %p76, %p77
      %p79 = scmp.ne.s32.totalorder %s71, %s73
      %p80 = scmp.eq.s32.totalorder %s21, 1
      %p81 = por %p79, %p80
      %p82 = scmp.ne.s32.totalorder %s73, %s74
      %p83 = scmp.eq.s32.totalorder %s21, 0
      %p84 = por %p82, %p83
      %p85 = scmp.ne.s32.totalorder %s73, %s74
      %p86 = scmp.eq.s32.totalorder %s22, 1
      %p87 = por %p85, %p86
      %p89 = scmp.ne.s32.totalorder %s74, %s88
      %p90 = scmp.eq.s32.totalorder %s22, 0
      %p91 = por %p89, %p90
      %s92 = ssub.s32 %s16, %s23
      %p93 = scmp.eq.s32.totalorder %s92, 0
      %s95 = sadd.s32 %s94, 1
      %s96 = scalar_select %p93, %s94, %s95
      %p99 = pneg %p93
      %p100 = scmp.eq.s32.totalorder %s16, 1
      %p101 = por %p99, %p100
      %p102 = scmp.ne.s32.totalorder %s94, %s97
      %p103 = scmp.eq.s32.totalorder %s16, 0
      %p104 = por %p102, %p103
      %p105 = scmp.ne.s32.totalorder %s94, %s97
      %p106 = scmp.eq.s32.totalorder %s21, 1
      %p107 = por %p105, %p106
      %p108 = scmp.ne.s32.totalorder %s97, %s98
      %p109 = scmp.eq.s32.totalorder %s21, 0
      %p110 = por %p108, %p109
      %p111 = scmp.ne.s32.totalorder %s97, %s98
      %p112 = scmp.eq.s32.totalorder %s22, 1
      %p113 = por %p111, %p112
      %p115 = scmp.ne.s32.totalorder %s98, %s114
      %p116 = scmp.eq.s32.totalorder %s22, 0
      %p117 = por %p115, %p116
      %p118 = scmp.le.s32.totalorder 1, %s16
      %p119 = scmp.lt.s32.totalorder %s16, 3
      %p120 = pnand %p118, %p119
      %p121 = pneg %p120
      // Predicated region
      $region9: #{tpu_custom_call.1} parent=5 // pred_check
        _
      $region10: #{tpu_custom_call.1} parent=5 // pred_check_branch
        %123 = sbr.rel (%p120) target = $region12
      $region11: #{tpu_custom_call.1} parent=5 // pred_region
        %s124 = ssub.s32 %s16, 1
        // Predicated region
        $region13: #{tpu_custom_call.1} parent=11 // pred_check
          %p125 = pneg %p63
        $region14: #{tpu_custom_call.1} parent=11 // pred_check_branch
          %127 = sbr.rel (%p125) target = $region16
        $region15: #{tpu_custom_call.1} parent=11 // pred_region
          %s129 = ssub.s32 10240, 10240
          %130 = vsyncadd [#allocation6], %s129
          %s131 = sshll.u32 [#allocation5], 4
          %s132 = int_to_ptr.vmem [resolvable:$true] %s131
          %137 = dma.hbm_to_vmem [thread:$0]  %s1, 10240, %s132, [#allocation6], 128, 128, 8
        $region16: #{tpu_custom_call.1} parent=11 // pred_fallthru
          _
        // Predicated region
        $region17: #{tpu_custom_call.1} parent=11 // pred_check
          %p138 = pneg %p84
        $region18: #{tpu_custom_call.1} parent=11 // pred_check_branch
          %140 = sbr.rel (%p138) target = $region20
        $region19: #{tpu_custom_call.1} parent=11 // pred_region
          _
        $region20: #{tpu_custom_call.1} parent=11 // pred_fallthru
          _
      $region12: #{tpu_custom_call.1} parent=5 // pred_fallthru
        _
      %p141 = scmp.lt.s32.totalorder %s16, 2
      // Predicated region
      $region21: #{tpu_custom_call.1} parent=5 // pred_check
        %p142 = pneg %p141
      $region22: #{tpu_custom_call.1} parent=5 // pred_check_branch
        %144 = sbr.rel (%p142) target = $region24
      $region23: #{tpu_custom_call.1} parent=5 // pred_region
        // Predicated region
        $region25: #{tpu_custom_call.1} parent=23 // pred_check
          %p145 = pneg %p36
        $region26: #{tpu_custom_call.1} parent=23 // pred_check_branch
          %147 = sbr.rel (%p145) target = $region28
        $region27: #{tpu_custom_call.1} parent=23 // pred_region
          %s148 = sand.u32 %s26, 1
          %s149 = scalar_lea.sflag [#allocation3], %s148
          %s150 = sand.u32 %s26, 1
          %s151 = smul.addr %s150, 80
          %s152 = scalar_lea.vmem [#allocation2], %s151
          %s153 = smul.u32 2, %s16
          %s154 = ssub.s32 3, %s153
          %p155 = scmp.lt.s32.totalorder %s154, 2
          %s156 = scalar_select %p155, %s154, 2
          %s157 = smul.u32 128, %s156
          %s158 = smul.u32 %s157, 5
          %s160 = ssub.s32 1280, %s158
          %161 = vsyncadd %s149, %s160
          %p162 = scmp.ne.s32.totalorder 0, %s158
          %s163 = smul.addr %s153, 5
          %s164 = smul.addr %s163, 128
          %s165 = scalar_lea.hbm %s0, %s164
          %s166 = smul.u32 40, %s156
          %s167 = sshll.u32 %s152, 4
          %s168 = int_to_ptr.vmem [resolvable:$true] %s167
          %s169 = sshll.u32 %s166, 4
          %173 = dma.hbm_to_vmem [thread:$0]  (%p162), %s165, %s169, %s168, %s149, 640, 640, 40
        $region28: #{tpu_custom_call.1} parent=23 // pred_fallthru
          _
      $region24: #{tpu_custom_call.1} parent=5 // pred_fallthru
        _
      %p174 = scmp.le.s32.totalorder 1, %s16
      %p175 = scmp.lt.s32.totalorder %s16, 3
      %p176 = pnand %p174, %p175
      %p177 = pneg %p176
      // Predicated region
      $region29: #{tpu_custom_call.1} parent=5 // pred_check
        _
      $region30: #{tpu_custom_call.1} parent=5 // pred_check_branch
        %179 = sbr.rel (%p176) target = $region32
      $region31: #{tpu_custom_call.1} parent=5 // pred_region
        %s180 = ssub.s32 %s16, 1
        %s181 = sand.u32 %s29, 1
        %s182 = scalar_lea.sflag [#allocation3], %s181
        %s183 = sand.u32 %s29, 1
        %s184 = smul.addr %s183, 80
        %s185 = scalar_lea.vmem [#allocation2], %s184
        // Predicated region
        $region33: #{tpu_custom_call.1} parent=31 // pred_check
          %p186 = pneg %p42
        $region34: #{tpu_custom_call.1} parent=31 // pred_check_branch
          %188 = sbr.rel (%p186) target = $region36
        $region35: #{tpu_custom_call.1} parent=31 // pred_region
          %189 = dma.done %s182, 1280
        $region36: #{tpu_custom_call.1} parent=31 // pred_fallthru
          _
        // Predicated region
        $region37: #{tpu_custom_call.1} parent=31 // pred_check
          %p190 = pneg %p63
        $region38: #{tpu_custom_call.1} parent=31 // pred_check_branch
          %192 = sbr.rel (%p190) target = $region40
        $region39: #{tpu_custom_call.1} parent=31 // pred_region
          %193 = dma.done [#allocation6], 10240
        $region40: #{tpu_custom_call.1} parent=31 // pred_fallthru
          _
        %s194 = sand.u32 %s29, 1
        %s195 = scalar_lea.sflag [#allocation3], %s194
        %s196 = sand.u32 %s29, 1
        %s197 = smul.addr %s196, 80
        %s198 = scalar_lea.vmem [#allocation2], %s197
        %p199 = pneg %p42
        %p200 = pneg %p39
        %p201 = pneg %p63
        %p202 = pneg %p60
        %p203 = pneg %p84
        %p204 = pneg %p81
        %p205 = pneg %p110
        %p206 = pneg %p107
        %s207 = sand.u32 %s97, 1
        %s208 = scalar_lea.sflag [#allocation4], %s207
        %s209 = sand.u32 %s97, 1
        %s210 = smul.addr %s209, 16
        %s211 = scalar_lea.vmem [#allocation7], %s210
        %s212 = smul.u32 2, %s21
        %s213 = ssub.s32 3, %s212
        %p214 = scmp.lt.s32.totalorder %s213, 2
        %s215 = scalar_select %p214, %s213, 2
        %s216 = smul.u32 128, %s215
        %s217 = smul.u32 %s216, 5
        %s218 = smul.u32 2, %s21
        %s219 = ssub.s32 3, %s218
        %p220 = scmp.lt.s32.totalorder %s219, 2
        %s221 = scalar_select %p220, %s219, 2
        %s222 = smul.u32 128, %s221
        %v223 = vld [vmem:[%s185] sm:$0xff]
        %v224 = vld [vmem:[%s185 + $0x8] sm:$0xff]
        %v225 = vld [vmem:[%s185 + $0x10] sm:$0xff]
        %v226 = vld [vmem:[%s185 + $0x18] sm:$0xff]
        %v227 = vld [vmem:[%s185 + $0x20] sm:$0xff]
        %v228 = vld [vmem:[%s185 + $0x28] sm:$0xff]
        %v229 = vld [vmem:[%s185 + $0x30] sm:$0xff]
        %v230 = vld [vmem:[%s185 + $0x38] sm:$0xff]
        %v231 = vld [vmem:[%s185 + $0x40] sm:$0xff]
        %v232 = vld [vmem:[%s185 + $0x48] sm:$0xff]
        %v233 = vld [vmem:[#allocation5] sm:$0xff]
        %v234 = vld [vmem:[#allocation5 + $0x8] sm:$0xff]
        %v235 = vld [vmem:[#allocation5 + $0x10] sm:$0xff]
        %v236 = vld [vmem:[#allocation5 + $0x18] sm:$0xff]
        %v237 = vld [vmem:[#allocation5 + $0x20] sm:$0xff]
        %v238 = vld [vmem:[#allocation5 + $0x28] sm:$0xff]
        %v239 = vld [vmem:[#allocation5 + $0x30] sm:$0xff]
        %v240 = vld [vmem:[#allocation5 + $0x38] sm:$0xff]
        %v241 = vld [vmem:[#allocation5 + $0x40] sm:$0xff]
        %v242 = vld [vmem:[#allocation5 + $0x48] sm:$0xff]
        %v243 = vld [vmem:[#allocation5 + $0x50] sm:$0xff]
        %v244 = vld [vmem:[#allocation5 + $0x58] sm:$0xff]
        %v245 = vld [vmem:[#allocation5 + $0x60] sm:$0xff]
        %v246 = vld [vmem:[#allocation5 + $0x68] sm:$0xff]
        %v247 = vld [vmem:[#allocation5 + $0x70] sm:$0xff]
        %v248 = vld [vmem:[#allocation5 + $0x78] sm:$0xff]
        %v249 = vld [vmem:[#allocation5 + $0x80] sm:$0xff]
        %v250 = vld [vmem:[#allocation5 + $0x88] sm:$0xff]
        %v251 = vld [vmem:[#allocation5 + $0x90] sm:$0xff]
        %v252 = vld [vmem:[#allocation5 + $0x98] sm:$0xff]
        %v253 = vld [vmem:[#allocation5 + $0xa0] sm:$0xff]
        %v254 = vld [vmem:[#allocation5 + $0xa8] sm:$0xff]
        %v255 = vld [vmem:[#allocation5 + $0xb0] sm:$0xff]
        %v256 = vld [vmem:[#allocation5 + $0xb8] sm:$0xff]
        %v257 = vld [vmem:[#allocation5 + $0xc0] sm:$0xff]
        %v258 = vld [vmem:[#allocation5 + $0xc8] sm:$0xff]
        %v259 = vld [vmem:[#allocation5 + $0xd0] sm:$0xff]
        %v260 = vld [vmem:[#allocation5 + $0xd8] sm:$0xff]
        %v261 = vld [vmem:[#allocation5 + $0xe0] sm:$0xff]
        %v262 = vld [vmem:[#allocation5 + $0xe8] sm:$0xff]
        %v263 = vld [vmem:[#allocation5 + $0xf0] sm:$0xff]
        %v264 = vld [vmem:[#allocation5 + $0xf8] sm:$0xff]
        %v265 = vld [vmem:[#allocation5 + $0x100] sm:$0xff]
        %v266 = vld [vmem:[#allocation5 + $0x108] sm:$0xff]
        %v267 = vld [vmem:[#allocation5 + $0x110] sm:$0xff]
        %v268 = vld [vmem:[#allocation5 + $0x118] sm:$0xff]
        %v269 = vld [vmem:[#allocation5 + $0x120] sm:$0xff]
        %v270 = vld [vmem:[#allocation5 + $0x128] sm:$0xff]
        %v271 = vld [vmem:[#allocation5 + $0x130] sm:$0xff]
        %v272 = vld [vmem:[#allocation5 + $0x138] sm:$0xff]
        %v273 = vld [vmem:[#allocation5 + $0x140] sm:$0xff]
        %v274 = vld [vmem:[#allocation5 + $0x148] sm:$0xff]
        %v275 = vld [vmem:[#allocation5 + $0x150] sm:$0xff]
        %v276 = vld [vmem:[#allocation5 + $0x158] sm:$0xff]
        %v277 = vld [vmem:[#allocation5 + $0x160] sm:$0xff]
        %v278 = vld [vmem:[#allocation5 + $0x168] sm:$0xff]
        %v279 = vld [vmem:[#allocation5 + $0x170] sm:$0xff]
        %v280 = vld [vmem:[#allocation5 + $0x178] sm:$0xff]
        %v281 = vld [vmem:[#allocation5 + $0x180] sm:$0xff]
        %v282 = vld [vmem:[#allocation5 + $0x188] sm:$0xff]
        %v283 = vld [vmem:[#allocation5 + $0x190] sm:$0xff]
        %v284 = vld [vmem:[#allocation5 + $0x198] sm:$0xff]
        %v285 = vld [vmem:[#allocation5 + $0x1a0] sm:$0xff]
        %v286 = vld [vmem:[#allocation5 + $0x1a8] sm:$0xff]
        %v287 = vld [vmem:[#allocation5 + $0x1b0] sm:$0xff]
        %v288 = vld [vmem:[#allocation5 + $0x1b8] sm:$0xff]
        %v289 = vld [vmem:[#allocation5 + $0x1c0] sm:$0xff]
        %v290 = vld [vmem:[#allocation5 + $0x1c8] sm:$0xff]
        %v291 = vld [vmem:[#allocation5 + $0x1d0] sm:$0xff]
        %v292 = vld [vmem:[#allocation5 + $0x1d8] sm:$0xff]
        %v293 = vld [vmem:[#allocation5 + $0x1e0] sm:$0xff]
        %v294 = vld [vmem:[#allocation5 + $0x1e8] sm:$0xff]
        %v295 = vld [vmem:[#allocation5 + $0x1f0] sm:$0xff]
        %v296 = vld [vmem:[#allocation5 + $0x1f8] sm:$0xff]
        %v297 = vld [vmem:[#allocation5 + $0x200] sm:$0xff]
        %v298 = vld [vmem:[#allocation5 + $0x208] sm:$0xff]
        %v299 = vld [vmem:[#allocation5 + $0x210] sm:$0xff]
        %v300 = vld [vmem:[#allocation5 + $0x218] sm:$0xff]
        %v301 = vld [vmem:[#allocation5 + $0x220] sm:$0xff]
        %v302 = vld [vmem:[#allocation5 + $0x228] sm:$0xff]
        %v303 = vld [vmem:[#allocation5 + $0x230] sm:$0xff]
        %v304 = vld [vmem:[#allocation5 + $0x238] sm:$0xff]
        %v305 = vld [vmem:[#allocation5 + $0x240] sm:$0xff]
        %v306 = vld [vmem:[#allocation5 + $0x248] sm:$0xff]
        %v307 = vld [vmem:[#allocation5 + $0x250] sm:$0xff]
        %v308 = vld [vmem:[#allocation5 + $0x258] sm:$0xff]
        %v309 = vld [vmem:[#allocation5 + $0x260] sm:$0xff]
        %v310 = vld [vmem:[#allocation5 + $0x268] sm:$0xff]
        %v311 = vld [vmem:[#allocation5 + $0x270] sm:$0xff]
        %v312 = vld [vmem:[#allocation5 + $0x278] sm:$0xff]
        %v313 = vld [vmem:[%s2] sm:$0x1]
        %v315 = vlaneseq
        %v316 = vshrl.u32 %v315, 7
        %v317 = vsub.s32 0, %v316
        %v318 = vrot.slane %v313, %v317
        %320 = vmatprep.subr.mxu0 0.0
        %321 = vmatpush1.msra.mxu0 %v233
        %322 = vmatprep.subr.mxu0 0.0
        %323 = vmatpush1.msra.mxu0 %v234
        %324 = vmatprep.subr.mxu0 0.0
        %325 = vmatpush1.msra.mxu0 %v235
        %326 = vmatprep.subr.mxu0 0.0
        %327 = vmatpush1.msra.mxu0 %v236
        %328 = vmatprep.subr.mxu0 0.0
        %329 = vmatpush1.msra.mxu0 %v237
        %330 = vmatprep.subr.mxu0 0.0
        %331 = vmatpush1.msra.mxu0 %v238
        %332 = vmatprep.subr.mxu0 0.0
        %333 = vmatpush1.msra.mxu0 %v239
        %334 = vmatprep.subr.mxu0 0.0
        %335 = vmatpush1.msra.mxu0 %v240
        %336 = vmatprep.subr.mxu0 0.0
        %337 = vmatpush1.msra.mxu0 %v241
        %338 = vmatprep.subr.mxu0 0.0
        %339 = vmatpush1.msra.mxu0 %v242
        %340 = vmatprep.subr.mxu0 0.0
        %341 = vmatpush1.msra.mxu0 %v243
        %342 = vmatprep.subr.mxu0 0.0
        %343 = vmatpush1.msra.mxu0 %v244
        %344 = vmatprep.subr.mxu0 0.0
        %345 = vmatpush1.msra.mxu0 %v245
        %346 = vmatprep.subr.mxu0 0.0
        %347 = vmatpush1.msra.mxu0 %v246
        %348 = vmatprep.subr.mxu0 0.0
        %349 = vmatpush1.msra.mxu0 %v247
        %350 = vmatprep.subr.mxu0 0.0
        %351 = vmatpush1.msra.mxu0 %v248
        %352 = vmatprep.subr.mxu0 0.0
        %353 = vmatpush1.msra.mxu0 %v249
        %354 = vmatprep.subr.mxu0 0.0
        %355 = vmatpush1.msra.mxu0 %v250
        %356 = vmatprep.subr.mxu0 0.0
        %357 = vmatpush1.msra.mxu0 %v251
        %358 = vmatprep.subr.mxu0 0.0
        %359 = vmatpush1.msra.mxu0 %v252
        %360 = vmatprep.subr.mxu0 0.0
        %361 = vmatpush1.msra.mxu0 %v253
        %362 = vmatprep.subr.mxu0 0.0
        %363 = vmatpush1.msra.mxu0 %v254
        %364 = vmatprep.subr.mxu0 0.0
        %365 = vmatpush1.msra.mxu0 %v255
        %366 = vmatprep.subr.mxu0 0.0
        %367 = vmatpush1.msra.mxu0 %v256
        %368 = vmatprep.subr.mxu0 0.0
        %369 = vmatpush1.msra.mxu0 %v257
        %370 = vmatprep.subr.mxu0 0.0
        %371 = vmatpush1.msra.mxu0 %v258
        %372 = vmatprep.subr.mxu0 0.0
        %373 = vmatpush1.msra.mxu0 %v259
        %374 = vmatprep.subr.mxu0 0.0
        %375 = vmatpush1.msra.mxu0 %v260
        %376 = vmatprep.subr.mxu0 0.0
        %377 = vmatpush1.msra.mxu0 %v261
        %378 = vmatprep.subr.mxu0 0.0
        %379 = vmatpush1.msra.mxu0 %v262
        %380 = vmatprep.subr.mxu0 0.0
        %381 = vmatpush1.msra.mxu0 %v263
        %382 = vmatprep.subr.mxu0 0.0
        %383 = vmatpush1.msra.mxu0 %v264
        %384 = vmatprep.mubr.f32.mxu0 %v224
        %385 = vmatmul.mubr.f32.gmra.mrb[0].mxu0 %v223
        %v386 = vpop.f32.mrb[0].mxu0
        %v387 = vadd.f32 %v318, %v386
        %v388 = vpop.f32.mrb[0].mxu0
        %389 = vmatprep.mubr.f32.mxu0 %v229
        %390 = vmatmul.mubr.f32.gmra.mrb[0].mxu0 %v228
        %v391 = vpop.f32.mrb[0].mxu0
        %v392 = vadd.f32 %v318, %v391
        %v393 = vpop.f32.mrb[0].mxu0
        %394 = vdwg.mxu0
        %395 = vmatprep.subr.mxu0 0.0
        %396 = vmatpush1.msra.mxu0 %v265
        %397 = vmatprep.subr.mxu0 0.0
        %398 = vmatpush1.msra.mxu0 %v266
        %399 = vmatprep.subr.mxu0 0.0
        %400 = vmatpush1.msra.mxu0 %v267
        %401 = vmatprep.subr.mxu0 0.0
        %402 = vmatpush1.msra.mxu0 %v268
        %403 = vmatprep.subr.mxu0 0.0
        %404 = vmatpush1.msra.mxu0 %v269
        %405 = vmatprep.subr.mxu0 0.0
        %406 = vmatpush1.msra.mxu0 %v270
        %407 = vmatprep.subr.mxu0 0.0
        %408 = vmatpush1.msra.mxu0 %v271
        %409 = vmatprep.subr.mxu0 0.0
        %410 = vmatpush1.msra.mxu0 %v272
        %411 = vmatprep.subr.mxu0 0.0
        %412 = vmatpush1.msra.mxu0 %v273
        %413 = vmatprep.subr.mxu0 0.0
        %414 = vmatpush1.msra.mxu0 %v274
        %415 = vmatprep.subr.mxu0 0.0
        %416 = vmatpush1.msra.mxu0 %v275
        %417 = vmatprep.subr.mxu0 0.0
        %418 = vmatpush1.msra.mxu0 %v276
        %419 = vmatprep.subr.mxu0 0.0
        %420 = vmatpush1.msra.mxu0 %v277
        %421 = vmatprep.subr.mxu0 0.0
        %422 = vmatpush1.msra.mxu0 %v278
        %423 = vmatprep.subr.mxu0 0.0
        %424 = vmatpush1.msra.mxu0 %v279
        %425 = vmatprep.subr.mxu0 0.0
        %426 = vmatpush1.msra.mxu0 %v280
        %427 = vmatprep.subr.mxu0 0.0
        %428 = vmatpush1.msra.mxu0 %v281
        %429 = vmatprep.subr.mxu0 0.0
        %430 = vmatpush1.msra.mxu0 %v282
        %431 = vmatprep.subr.mxu0 0.0
        %432 = vmatpush1.msra.mxu0 %v283
        %433 = vmatprep.subr.mxu0 0.0
        %434 = vmatpush1.msra.mxu0 %v284
        %435 = vmatprep.subr.mxu0 0.0
        %436 = vmatpush1.msra.mxu0 %v285
        %437 = vmatprep.subr.mxu0 0.0
        %438 = vmatpush1.msra.mxu0 %v286
        %439 = vmatprep.subr.mxu0 0.0
        %440 = vmatpush1.msra.mxu0 %v287
        %441 = vmatprep.subr.mxu0 0.0
        %442 = vmatpush1.msra.mxu0 %v288
        %443 = vmatprep.subr.mxu0 0.0
        %444 = vmatpush1.msra.mxu0 %v289
        %445 = vmatprep.subr.mxu0 0.0
        %446 = vmatpush1.msra.mxu0 %v290
        %447 = vmatprep.subr.mxu0 0.0
        %448 = vmatpush1.msra.mxu0 %v291
        %449 = vmatprep.subr.mxu0 0.0
        %450 = vmatpush1.msra.mxu0 %v292
        %451 = vmatprep.subr.mxu0 0.0
        %452 = vmatpush1.msra.mxu0 %v293
        %453 = vmatprep.subr.mxu0 0.0
        %454 = vmatpush1.msra.mxu0 %v294
        %455 = vmatprep.subr.mxu0 0.0
        %456 = vmatpush1.msra.mxu0 %v295
        %457 = vmatprep.subr.mxu0 0.0
        %458 = vmatpush1.msra.mxu0 %v296
        %459 = vmatprep.mubr.f32.mxu0 %v226
        %460 = vmatmul.mubr.f32.gmra.mrb[0].mxu0 %v225
        %v461 = vpop.f32.mrb[0].mxu0
        %v462 = vadd.f32 %v387, %v461
        %v463 = vpop.f32.mrb[0].mxu0
        %464 = vmatprep.mubr.f32.mxu0 %v231
        %465 = vmatmul.mubr.f32.gmra.mrb[0].mxu0 %v230
        %v466 = vpop.f32.mrb[0].mxu0
        %v467 = vadd.f32 %v392, %v466
        %v468 = vpop.f32.mrb[0].mxu0
        %469 = vdwg.mxu0
        %470 = vmatprep.subr.mxu0 0.0
        %471 = vmatpush1.msra.mxu0 %v297
        %472 = vmatprep.subr.mxu0 0.0
        %473 = vmatpush1.msra.mxu0 %v298
        %474 = vmatprep.subr.mxu0 0.0
        %475 = vmatpush1.msra.mxu0 %v299
        %476 = vmatprep.subr.mxu0 0.0
        %477 = vmatpush1.msra.mxu0 %v300
        %478 = vmatprep.subr.mxu0 0.0
        %479 = vmatpush1.msra.mxu0 %v301
        %480 = vmatprep.subr.mxu0 0.0
        %481 = vmatpush1.msra.mxu0 %v302
        %482 = vmatprep.subr.mxu0 0.0
        %483 = vmatpush1.msra.mxu0 %v303
        %484 = vmatprep.subr.mxu0 0.0
        %485 = vmatpush1.msra.mxu0 %v304
        %486 = vmatprep.subr.mxu0 0.0
        %487 = vmatpush1.msra.mxu0 %v305
        %488 = vmatprep.subr.mxu0 0.0
        %489 = vmatpush1.msra.mxu0 %v306
        %490 = vmatprep.subr.mxu0 0.0
        %491 = vmatpush1.msra.mxu0 %v307
        %492 = vmatprep.subr.mxu0 0.0
        %493 = vmatpush1.msra.mxu0 %v308
        %494 = vmatprep.subr.mxu0 0.0
        %495 = vmatpush1.msra.mxu0 %v309
        %496 = vmatprep.subr.mxu0 0.0
        %497 = vmatpush1.msra.mxu0 %v310
        %498 = vmatprep.subr.mxu0 0.0
        %499 = vmatpush1.msra.mxu0 %v311
        %500 = vmatprep.subr.mxu0 0.0
        %501 = vmatpush1.msra.mxu0 %v312
        %502 = vmatprep.subr.mxu0 0.0
        %503 = vmatpush1.msra.mxu0 0.0
        %504 = vmatprep.subr.mxu0 0.0
        %505 = vmatpush1.msra.mxu0 0.0
        %506 = vmatprep.subr.mxu0 0.0
        %507 = vmatpush1.msra.mxu0 0.0
        %508 = vmatprep.subr.mxu0 0.0
        %509 = vmatpush1.msra.mxu0 0.0
        %510 = vmatprep.subr.mxu0 0.0
        %511 = vmatpush1.msra.mxu0 0.0
        %512 = vmatprep.subr.mxu0 0.0
        %513 = vmatpush1.msra.mxu0 0.0
        %514 = vmatprep.subr.mxu0 0.0
        %515 = vmatpush1.msra.mxu0 0.0
        %516 = vmatprep.subr.mxu0 0.0
        %517 = vmatpush1.msra.mxu0 0.0
        %518 = vmatprep.subr.mxu0 0.0
        %519 = vmatpush1.msra.mxu0 0.0
        %520 = vmatprep.subr.mxu0 0.0
        %521 = vmatpush1.msra.mxu0 0.0
        %522 = vmatprep.subr.mxu0 0.0
        %523 = vmatpush1.msra.mxu0 0.0
        %524 = vmatprep.subr.mxu0 0.0
        %525 = vmatpush1.msra.mxu0 0.0
        %526 = vmatprep.subr.mxu0 0.0
        %527 = vmatpush1.msra.mxu0 0.0
        %528 = vmatprep.subr.mxu0 0.0
        %529 = vmatpush1.msra.mxu0 0.0
        %530 = vmatprep.subr.mxu0 0.0
        %531 = vmatpush1.msra.mxu0 0.0
        %532 = vmatprep.subr.mxu0 0.0
        %533 = vmatpush1.msra.mxu0 0.0
        %534 = vmatprep.mubr.f32.mxu0 0.0
        %535 = vmatmul.mubr.f32.gmra.mrb[0].mxu0 %v227
        %v536 = vpop.f32.mrb[0].mxu0
        %v537 = vadd.f32 %v462, %v536
        %v538 = vpop.f32.mrb[0].mxu0
        %539 = vmatprep.mubr.f32.mxu0 0.0
        %540 = vmatmul.mubr.f32.gmra.mrb[0].mxu0 %v232
        %v541 = vpop.f32.mrb[0].mxu0
        %v542 = vadd.f32 %v467, %v541
        %v543 = vpop.f32.mrb[0].mxu0
        %544 = vdwg.mxu0
        %v545 = vmax.f32 %v537, 0.0
        %v546 = vmax.f32 %v542, 0.0
        %547 = vst [vmem:[%s211] sm:$0xff] %v545
        %548 = vst [vmem:[%s211 + $0x8] sm:$0xff] %v546
        %s549 = sand.u32 %s97, 1
        %s550 = scalar_lea.sflag [#allocation4], %s549
        %s551 = sand.u32 %s97, 1
        %s552 = smul.addr %s551, 16
        %s553 = scalar_lea.vmem [#allocation7], %s552
        // Predicated region
        $region41: #{tpu_custom_call.1} parent=31 // pred_check
          %p554 = pneg %p107
        $region42: #{tpu_custom_call.1} parent=31 // pred_check_branch
          %556 = sbr.rel (%p554) target = $region44
        $region43: #{tpu_custom_call.1} parent=31 // pred_region
          %s557 = smul.u32 2, %s21
          %s558 = ssub.s32 3, %s557
          %p559 = scmp.lt.s32.totalorder %s558, 2
          %s560 = scalar_select %p559, %s558, 2
          %s561 = smul.u32 128, %s560
          %s563 = ssub.s32 256, %s561
          %564 = vsyncadd %s550, %s563
          %p565 = scmp.ne.s32.totalorder 0, %s561
          %s566 = smul.addr %s557, 128
          %s567 = scalar_lea.hbm %s3, %s566
          %s568 = smul.u32 8, %s560
          %s569 = sshll.u32 %s553, 4
          %s570 = int_to_ptr.vmem [resolvable:$true] %s569
          %s571 = sshll.u32 %s568, 4
          %575 = dma.vmem_to_hbm [thread:$0]  (%p565), %s570, %s571, %s567, %s550, 128, 128, 8
        $region44: #{tpu_custom_call.1} parent=31 // pred_fallthru
          _
      $region32: #{tpu_custom_call.1} parent=5 // pred_fallthru
        _
      %p576 = scmp.le.s32.totalorder 2, %s16
      // Predicated region
      $region45: #{tpu_custom_call.1} parent=5 // pred_check
        %p577 = pneg %p576
      $region46: #{tpu_custom_call.1} parent=5 // pred_check_branch
        %579 = sbr.rel (%p577) target = $region48
      $region47: #{tpu_custom_call.1} parent=5 // pred_region
        %s580 = ssub.s32 %s16, 2
        // Predicated region
        $region49: #{tpu_custom_call.1} parent=47 // pred_check
          %p581 = pneg %p113
        $region50: #{tpu_custom_call.1} parent=47 // pred_check_branch
          %583 = sbr.rel (%p581) target = $region52
        $region51: #{tpu_custom_call.1} parent=47 // pred_region
          %s584 = sand.u32 %s98, 1
          %s585 = scalar_lea.sflag [#allocation4], %s584
          %s586 = sand.u32 %s98, 1
          %s587 = smul.addr %s586, 16
          %s588 = scalar_lea.vmem [#allocation7], %s587
          %589 = dma.done %s585, 256
        $region52: #{tpu_custom_call.1} parent=47 // pred_fallthru
          _
      $region48: #{tpu_custom_call.1} parent=5 // pred_fallthru
        _
    $region6: #{tpu_custom_call.1} parent=1 // loop_footer
      %s20 = sadd.s32 1, %s16
    $region7: #{tpu_custom_call.1} parent=1 // loop_footer_branch
      %15 = sbr.rel target = $region3
    $region8: #{tpu_custom_call.1} parent=1 // loop_exit
      _
    %590 = vsyncpa [#allocation3], 1
    %s591 = scalar_lea.sflag [#allocation3], 1
    %592 = vsyncpa %s591, 1
    %593 = vsyncpa [#allocation6], 1
    %594 = vsyncpa [#allocation4], 1
    %s595 = scalar_lea.sflag [#allocation4], 1
    %596 = vsyncpa %s595, 1

</llo_original>
